<compile_context>
chip_gen: v6e
topology: v6e:2x2x1
jax: 0.10.0
libtpu: 0.0.40
codegen_flags: <defaults>
</compile_context>

<pallas_src>
import math

import jax
import jax.numpy as jnp
from jax.experimental import pallas as pl
from jax.experimental.pallas import tpu as pltpu  # noqa: F401  (TPU backend)

# ----------------------------- config -----------------------------------
B = 2            # batch
S = 8            # sequence length
H = 32           # hidden_size
N_HEADS = 2
HEAD = H // N_HEADS
INTER = 64       # intermediate_size
C_PARAM = 5      # config "c"  -> cutoff = c // 2 + 1
ALPHA = 0.7
LN_EPS = 1e-12   # layer_norm_eps
BS = B * S       # folded batch*seq rows
HB = N_HEADS * BS  # head-stacked rows

# packed-vector row indices (rows of the (11, 4H) "vec" operand)
_ROW_BQKV, _ROW_B1, _ROW_BO, _ROW_B2 = 0, 1, 2, 3
_ROW_LNA_G, _ROW_LNA_B = 4, 5
_ROW_LNF_G, _ROW_LNF_B = 6, 7
_ROW_LNO_G, _ROW_LNO_B = 8, 9
_ROW_BETA2 = 10
_N_VEC_ROWS = 11


# ----------------------------- kernel ------------------------------------
def bsarec_block_kernel(x_ref, mask_ref, lp_ref, wqkv_ref, w1_ref, w2_ref,
                        vec_ref, out_ref):
    x = x_ref[...]                       # (BS, H) f32
    x_bf = x.astype(jnp.bfloat16)
    vec = vec_ref[...]                   # (11, 4H) f32 packed small vectors

    def row(i, width):
        return vec[i:i + 1, 0:width]     # (1, width)

    bqkv = row(_ROW_BQKV, 4 * H)
    b1 = row(_ROW_B1, INTER)
    bo = row(_ROW_BO, H)
    b2 = row(_ROW_B2, H)
    ln_a_g, ln_a_b = row(_ROW_LNA_G, H), row(_ROW_LNA_B, H)
    ln_f_g, ln_f_b = row(_ROW_LNF_G, H), row(_ROW_LNF_B, H)
    ln_o_g, ln_o_b = row(_ROW_LNO_G, H), row(_ROW_LNO_B, H)
    beta2 = row(_ROW_BETA2, H)           # beta ** 2 (pre-squared host-side)

    def layer_norm(v, g, b):
        # one-pass stats, clamped variance, rsqrt on the EUP
        mu = jnp.mean(v, axis=-1, keepdims=True)
        ms = jnp.mean(v * v, axis=-1, keepdims=True)
        var = jnp.maximum(ms - mu * mu, 0.0)
        return (v - mu) * jax.lax.rsqrt(var + LN_EPS) * g + b

    # -------- MultiHeadAttention branch (gsp) --------
    # fused [Q*scale | K | V_h0@Wo_h0 | V_h1@Wo_h1] projection: (BS, 4H)
    qkv = jnp.dot(x_bf, wqkv_ref[...],
                  preferred_element_type=jnp.float32) + bqkv

    # stack heads along sublanes -> single block-diagonal attention
    q_stk = jnp.concatenate(
        [qkv[:, 0:HEAD], qkv[:, HEAD:2 * HEAD]], axis=0).astype(jnp.bfloat16)          # (HB, HEAD)
    k_stk = jnp.concatenate(
        [qkv[:, 2 * HEAD:3 * HEAD], qkv[:, 3 * HEAD:4 * HEAD]], axis=0).astype(jnp.bfloat16)  # (HB, HEAD)
    v_stk = jnp.concatenate(
        [qkv[:, 2 * H:3 * H], qkv[:, 3 * H:4 * H]], axis=0).astype(jnp.bfloat16)       # (HB, H)

    # Q.K^T without transposing K (contract last dims of both operands)
    s = jax.lax.dot_general(q_stk, k_stk, (((1,), (1,)), ((), ())),
                            preferred_element_type=jnp.float32) + mask_ref[...]
    s = s - jnp.max(s, axis=-1, keepdims=True)
    p = jnp.exp(s)
    p = p * pl.reciprocal(jnp.sum(p, axis=-1, keepdims=True), approx=True)
    ctx = jnp.dot(p.astype(jnp.bfloat16), v_stk,
                  preferred_element_type=jnp.float32)                                  # (HB, H)
    attn = ctx[0:BS, :] + ctx[BS:HB, :] + bo
    gsp = layer_norm(attn + x, ln_a_g, ln_a_b)

    # -------- FrequencyLayer branch (dsp) --------
    # low_pass = irfft(mask(rfft(x))) == block_diag(Lmat) @ x  (precomputed)
    low = jnp.dot(lp_ref[...], x_bf, preferred_element_type=jnp.float32)
    femb = low + beta2 * (x - low)
    dsp = layer_norm(femb + x, ln_f_g, ln_f_b)

    # -------- combine + FeedForward --------
    mix = ALPHA * dsp + (1.0 - ALPHA) * gsp
    h1 = jnp.dot(mix.astype(jnp.bfloat16), w1_ref[...],
                 preferred_element_type=jnp.float32) + b1
    h1 = 0.5 * h1 * (1.0 + jax.lax.erf(h1 * (1.0 / math.sqrt(2.0))))   # exact gelu
    h2 = jnp.dot(h1.astype(jnp.bfloat16), w2_ref[...],
                 preferred_element_type=jnp.float32) + b2
    out_ref[...] = layer_norm(h2 + mix, ln_o_g, ln_o_b).astype(out_ref.dtype)


# ----------------------------- one-time constant prep ----------------------
def prepare_operands(params, attn_mask, lmat):
    """Builds all call-invariant operands once (hoisted out of the hot path)."""
    (wq, bq, wk, bk, wv, bv, wo, bo, ln_a_g, ln_a_b,
     fbeta, ln_f_g, ln_f_b, w1, b1, w2, b2, ln_o_g, ln_o_b) = params

    inv_sqrt_d = 1.0 / math.sqrt(HEAD)

    # fused QKV weight with softmax scale folded into Q and Wo folded into V
    w_parts = [wq * inv_sqrt_d, wk]
    b_parts = [bq * inv_sqrt_d, bk]
    for h in range(N_HEADS):
        sl = slice(h * HEAD, (h + 1) * HEAD)
        w_parts.append(wv[:, sl] @ wo[sl, :])   # (H, H)
        b_parts.append(bv[:, sl] @ wo[sl, :])   # (1, H)
    wqkv = jnp.concatenate(w_parts, axis=1)     # (H, 4H) = (32, 128)
    bqkv = jnp.concatenate(b_parts, axis=1)     # (1, 4H)

    # pack all tiny vectors into one (11, 4H) f32 slab
    def pad_row(v):
        v = jnp.asarray(v, jnp.float32).reshape(1, -1)
        return jnp.pad(v, ((0, 0), (0, 4 * H - v.shape[1])))

    vec = jnp.concatenate([
        pad_row(bqkv),                          # 0
        pad_row(b1),                            # 1
        pad_row(bo),                            # 2
        pad_row(b2),                            # 3
        pad_row(ln_a_g), pad_row(ln_a_b),       # 4, 5
        pad_row(ln_f_g), pad_row(ln_f_b),       # 6, 7
        pad_row(ln_o_g), pad_row(ln_o_b),       # 8, 9
        pad_row(fbeta * fbeta),                 # 10 (beta^2)
    ], axis=0)
    assert vec.shape == (_N_VEC_ROWS, 4 * H)

    # (head x batch) block-diagonal causal mask, (HB, HB), 0 / -10000
    mask32 = jnp.full((HB, HB), -10000.0, jnp.float32)
    for h in range(N_HEADS):
        for b in range(B):
            r0 = h * BS + b * S
            mask32 = mask32.at[r0:r0 + S, r0:r0 + S].set(attn_mask[b, 0])

    # block-diagonal low-pass projector (BS, BS)
    lp_blk = jnp.zeros((BS, BS), jnp.float32)
    for b in range(B):
        sl = slice(b * S, (b + 1) * S)
        lp_blk = lp_blk.at[sl, sl].set(lmat)

    return (mask32,
            lp_blk.astype(jnp.bfloat16),
            wqkv.astype(jnp.bfloat16),
            w1.astype(jnp.bfloat16),
            w2.astype(jnp.bfloat16),
            vec)


# ----------------------------- per-call wrapper -----------------------------
@jax.jit
def bsarec_block(x, mask32, lp_blk, wqkv, w1, w2, vec):
    """x: (B, S, H) f32; remaining args come from prepare_operands()."""
    out = pl.pallas_call(
        bsarec_block_kernel,
        out_shape=jax.ShapeDtypeStruct((BS, H), jnp.float32),
    )(x.reshape(BS, H), mask32, lp_blk, wqkv, w1, w2, vec)
    return out.reshape(B, S, H)


# ----------------------------- reference (pure JAX, f32) --------------------
def bsarec_block_ref(x, attn_mask, lmat, params):
    (wq, bq, wk, bk, wv, bv, wo, bo, ln_a_g, ln_a_b,
     fbeta, ln_f_g, ln_f_b, w1, b1, w2, b2, ln_o_g, ln_o_b) = params

    def ln(v, g, b, eps):
        mu = jnp.mean(v, axis=-1, keepdims=True)
        var = jnp.mean((v - mu) ** 2, axis=-1, keepdims=True)
        return (v - mu) / jnp.sqrt(var + eps) * g[0] + b[0]

    q = x @ wq + bq[0]
    k = x @ wk + bk[0]
    v = x @ wv + bv[0]
    qh = q.reshape(B, S, N_HEADS, HEAD).transpose(0, 2, 1, 3)
    kh = k.reshape(B, S, N_HEADS, HEAD).transpose(0, 2, 1, 3)
    vh = v.reshape(B, S, N_HEADS, HEAD).transpose(0, 2, 1, 3)
    scores = jnp.einsum("bhqd,bhkd->bhqk", qh, kh) / math.sqrt(HEAD) + attn_mask
    probs = jax.nn.softmax(scores, axis=-1)
    ctx = jnp.einsum("bhqk,bhkd->bhqd", probs, vh).transpose(0, 2, 1, 3).reshape(B, S, H)
    gsp = ln(ctx @ wo + bo[0] + x, ln_a_g, ln_a_b, LN_EPS)

    low = jnp.einsum("st,btd->bsd", lmat, x)
    high = x - low
    femb = low + (fbeta[0] ** 2) * high
    dsp = ln(femb + x, ln_f_g, ln_f_b, LN_EPS)

    mix = ALPHA * dsp + (1.0 - ALPHA) * gsp
    h1 = mix @ w1 + b1[0]
    h1 = 0.5 * h1 * (1.0 + jax.lax.erf(h1 / math.sqrt(2.0)))
    h2 = h1 @ w2 + b2[0]
    return ln(h2 + mix, ln_o_g, ln_o_b, LN_EPS)


# ----------------------------- main ----------------------------------------
if __name__ == "__main__":
    key = jax.random.PRNGKey(0)
    keys = jax.random.split(key, 24)

    def rnd(k, shape, scale=0.05):
        return (scale * jax.random.normal(k, shape)).astype(jnp.float32)

    # input
    x = rnd(keys[0], (B, S, H), scale=1.0)

    # causal extended attention mask (RecBole style: 0 / -10000)
    causal = jnp.tril(jnp.ones((S, S), dtype=jnp.float32))
    attn_mask = ((1.0 - causal) * -10000.0)[None, None].repeat(B, axis=0)

    # FFT low-pass projection matrix (rfft -> zero high freqs -> irfft is a
    # linear operator along the sequence axis)
    c_cut = C_PARAM // 2 + 1
    eye = jnp.eye(S, dtype=jnp.float32)
    freq = jnp.fft.rfft(eye, axis=0, norm="ortho")
    keep = (jnp.arange(S // 2 + 1) < c_cut)[:, None]
    lmat = jnp.fft.irfft(freq * keep, n=S, axis=0, norm="ortho").real.astype(jnp.float32)

    # parameters (deterministic synthetic init)
    params = (
        rnd(keys[1], (H, H)), rnd(keys[2], (1, H)),          # Wq, bq
        rnd(keys[3], (H, H)), rnd(keys[4], (1, H)),          # Wk, bk
        rnd(keys[5], (H, H)), rnd(keys[6], (1, H)),          # Wv, bv
        rnd(keys[7], (H, H)), rnd(keys[8], (1, H)),          # Wo, bo
        jnp.ones((1, H), jnp.float32), jnp.zeros((1, H), jnp.float32),   # attn LN
        rnd(keys[9], (1, H), scale=1.0),                     # FrequencyLayer beta
        jnp.ones((1, H), jnp.float32), jnp.zeros((1, H), jnp.float32),   # freq LN
        rnd(keys[10], (H, INTER)), rnd(keys[11], (1, INTER)),  # W1, b1
        rnd(keys[12], (INTER, H)), rnd(keys[13], (1, H)),      # W2, b2
        jnp.ones((1, H), jnp.float32), jnp.zeros((1, H), jnp.float32),   # ffn LN
    )

    # one-time constant/weight preparation (hoisted off the per-call path)
    consts = prepare_operands(params, attn_mask, lmat)

    out = jax.block_until_ready(bsarec_block(x, *consts))
    ref = bsarec_block_ref(x, attn_mask, lmat, params)

    assert out.shape == (B, S, H)
    # bf16 matmul operands (f32 accumulation) + approx EUP reciprocal in the
    # softmax + one-pass LN stats -> compare against the f32 reference with a
    # bf16-appropriate tolerance.
    err = float(jnp.max(jnp.abs(out - ref)))
    assert jnp.allclose(out, ref, atol=3e-2, rtol=3e-2), f"max err {err}"

    print("KERNEL_OK")
</pallas_src>

<mosaic_0001>
module attributes {stable_mosaic.version = 11 : i64} {
  func.func @bsarec_block_kernel(%arg0: memref<16x32xf32, #tpu.memory_space<vmem>>, %arg1: memref<32x32xf32, #tpu.memory_space<vmem>>, %arg2: memref<16x16xbf16, #tpu.memory_space<vmem>>, %arg3: memref<32x128xbf16, #tpu.memory_space<vmem>>, %arg4: memref<32x64xbf16, #tpu.memory_space<vmem>>, %arg5: memref<64x32xbf16, #tpu.memory_space<vmem>>, %arg6: memref<11x128xf32, #tpu.memory_space<vmem>>, %arg7: memref<16x32xf32, #tpu.memory_space<vmem>>) attributes {dimension_semantics = [], scalar_prefetch = 0 : i64, scratch_operands = 0 : i64, tpu.core_type = #tpu.core_type<tc>} {
    %c0 = arith.constant 0 : index
    %c0_0 = arith.constant 0 : index
    %0 = vector.load %arg0[%c0, %c0_0] : memref<16x32xf32, #tpu.memory_space<vmem>>, vector<16x32xf32>
    %1 = arith.truncf %0 : vector<16x32xf32> to vector<16x32xbf16>
    %c0_1 = arith.constant 0 : index
    %c0_2 = arith.constant 0 : index
    %2 = vector.load %arg6[%c0_1, %c0_2] : memref<11x128xf32, #tpu.memory_space<vmem>>, vector<11x128xf32>
    %3 = vector.extract_strided_slice %2 {offsets = [0, 0], sizes = [1, 128], strides = [1, 1]} : vector<11x128xf32> to vector<1x128xf32>
    %4 = vector.extract_strided_slice %2 {offsets = [1, 0], sizes = [1, 64], strides = [1, 1]} : vector<11x128xf32> to vector<1x64xf32>
    %5 = vector.extract_strided_slice %2 {offsets = [2, 0], sizes = [1, 32], strides = [1, 1]} : vector<11x128xf32> to vector<1x32xf32>
    %6 = vector.extract_strided_slice %2 {offsets = [3, 0], sizes = [1, 32], strides = [1, 1]} : vector<11x128xf32> to vector<1x32xf32>
    %7 = vector.extract_strided_slice %2 {offsets = [4, 0], sizes = [1, 32], strides = [1, 1]} : vector<11x128xf32> to vector<1x32xf32>
    %8 = vector.extract_strided_slice %2 {offsets = [5, 0], sizes = [1, 32], strides = [1, 1]} : vector<11x128xf32> to vector<1x32xf32>
    %9 = vector.extract_strided_slice %2 {offsets = [6, 0], sizes = [1, 32], strides = [1, 1]} : vector<11x128xf32> to vector<1x32xf32>
    %10 = vector.extract_strided_slice %2 {offsets = [7, 0], sizes = [1, 32], strides = [1, 1]} : vector<11x128xf32> to vector<1x32xf32>
    %11 = vector.extract_strided_slice %2 {offsets = [8, 0], sizes = [1, 32], strides = [1, 1]} : vector<11x128xf32> to vector<1x32xf32>
    %12 = vector.extract_strided_slice %2 {offsets = [9, 0], sizes = [1, 32], strides = [1, 1]} : vector<11x128xf32> to vector<1x32xf32>
    %13 = vector.extract_strided_slice %2 {offsets = [10, 0], sizes = [1, 32], strides = [1, 1]} : vector<11x128xf32> to vector<1x32xf32>
    %c0_3 = arith.constant 0 : index
    %c0_4 = arith.constant 0 : index
    %14 = vector.load %arg3[%c0_3, %c0_4] : memref<32x128xbf16, #tpu.memory_space<vmem>>, vector<32x128xbf16>
    %cst = arith.constant dense<0.000000e+00> : vector<16x128xf32>
    %15 = tpu.matmul %1, %14, %cst {dimension_numbers = #tpu.dot_dimension_numbers<[1], [0], [0], [1], [0, 0, 1, 1], [], []>} : vector<16x32xbf16>, vector<32x128xbf16>, vector<16x128xf32> -> vector<16x128xf32>
    %16 = vector.broadcast %3 : vector<1x128xf32> to vector<16x128xf32>
    %17 = arith.addf %15, %16 : vector<16x128xf32>
    %18 = vector.extract_strided_slice %17 {offsets = [0, 0], sizes = [16, 16], strides = [1, 1]} : vector<16x128xf32> to vector<16x16xf32>
    %19 = vector.extract_strided_slice %17 {offsets = [0, 16], sizes = [16, 16], strides = [1, 1]} : vector<16x128xf32> to vector<16x16xf32>
    %20 = tpu.concatenate %18, %19 in 0 : vector<16x16xf32>, vector<16x16xf32> -> vector<32x16xf32>
    %21 = arith.truncf %20 : vector<32x16xf32> to vector<32x16xbf16>
    %22 = vector.extract_strided_slice %17 {offsets = [0, 32], sizes = [16, 16], strides = [1, 1]} : vector<16x128xf32> to vector<16x16xf32>
    %23 = vector.extract_strided_slice %17 {offsets = [0, 48], sizes = [16, 16], strides = [1, 1]} : vector<16x128xf32> to vector<16x16xf32>
    %24 = tpu.concatenate %22, %23 in 0 : vector<16x16xf32>, vector<16x16xf32> -> vector<32x16xf32>
    %25 = arith.truncf %24 : vector<32x16xf32> to vector<32x16xbf16>
    %26 = vector.extract_strided_slice %17 {offsets = [0, 64], sizes = [16, 32], strides = [1, 1]} : vector<16x128xf32> to vector<16x32xf32>
    %27 = vector.extract_strided_slice %17 {offsets = [0, 96], sizes = [16, 32], strides = [1, 1]} : vector<16x128xf32> to vector<16x32xf32>
    %28 = tpu.concatenate %26, %27 in 0 : vector<16x32xf32>, vector<16x32xf32> -> vector<32x32xf32>
    %29 = arith.truncf %28 : vector<32x32xf32> to vector<32x32xbf16>
    %cst_5 = arith.constant dense<0.000000e+00> : vector<32x32xf32>
    %30 = tpu.matmul %21, %25, %cst_5 {dimension_numbers = #tpu.dot_dimension_numbers<[1], [1], [0], [0], [0, 0, 1, 0], [], []>} : vector<32x16xbf16>, vector<32x16xbf16>, vector<32x32xf32> -> vector<32x32xf32>
    %c0_6 = arith.constant 0 : index
    %c0_7 = arith.constant 0 : index
    %31 = vector.load %arg1[%c0_6, %c0_7] : memref<32x32xf32, #tpu.memory_space<vmem>>, vector<32x32xf32>
    %32 = arith.addf %30, %31 : vector<32x32xf32>
    %cst_8 = arith.constant dense<0xFF800000> : vector<32xf32>
    %33 = vector.multi_reduction <maximumf>, %32, %cst_8 [1] : vector<32x32xf32> to vector<32xf32>
    %34 = vector.shape_cast %33 : vector<32xf32> to vector<32x1xf32>
    %35 = vector.broadcast %34 : vector<32x1xf32> to vector<32x32xf32>
    %36 = arith.subf %32, %35 : vector<32x32xf32>
    %37 = math.exp %36 : vector<32x32xf32>
    %cst_9 = arith.constant dense<0.000000e+00> : vector<32xf32>
    %38 = vector.multi_reduction <add>, %37, %cst_9 [1] : vector<32x32xf32> to vector<32xf32>
    %39 = vector.shape_cast %38 : vector<32xf32> to vector<32x1xf32>
    %40 = tpu.reciprocal %39 {approx = true} : vector<32x1xf32> -> vector<32x1xf32>
    %41 = vector.broadcast %40 : vector<32x1xf32> to vector<32x32xf32>
    %42 = arith.mulf %37, %41 : vector<32x32xf32>
    %43 = arith.truncf %42 : vector<32x32xf32> to vector<32x32xbf16>
    %cst_10 = arith.constant dense<0.000000e+00> : vector<32x32xf32>
    %44 = tpu.matmul %43, %29, %cst_10 {dimension_numbers = #tpu.dot_dimension_numbers<[1], [0], [0], [1], [0, 0, 1, 1], [], []>} : vector<32x32xbf16>, vector<32x32xbf16>, vector<32x32xf32> -> vector<32x32xf32>
    %45 = vector.extract_strided_slice %44 {offsets = [0, 0], sizes = [16, 32], strides = [1, 1]} : vector<32x32xf32> to vector<16x32xf32>
    %46 = vector.extract_strided_slice %44 {offsets = [16, 0], sizes = [16, 32], strides = [1, 1]} : vector<32x32xf32> to vector<16x32xf32>
    %47 = arith.addf %45, %46 : vector<16x32xf32>
    %48 = vector.broadcast %5 : vector<1x32xf32> to vector<16x32xf32>
    %49 = arith.addf %47, %48 : vector<16x32xf32>
    %50 = arith.addf %49, %0 : vector<16x32xf32>
    %cst_11 = arith.constant dense<0.000000e+00> : vector<16xf32>
    %51 = vector.multi_reduction <add>, %50, %cst_11 [1] : vector<16x32xf32> to vector<16xf32>
    %52 = vector.shape_cast %51 : vector<16xf32> to vector<16x1xf32>
    %cst_12 = arith.constant 3.200000e+01 : f32
    %53 = vector.broadcast %cst_12 : f32 to vector<16x1xf32>
    %54 = arith.divf %52, %53 : vector<16x1xf32>
    %55 = arith.mulf %50, %50 : vector<16x32xf32>
    %cst_13 = arith.constant dense<0.000000e+00> : vector<16xf32>
    %56 = vector.multi_reduction <add>, %55, %cst_13 [1] : vector<16x32xf32> to vector<16xf32>
    %57 = vector.shape_cast %56 : vector<16xf32> to vector<16x1xf32>
    %cst_14 = arith.constant 3.200000e+01 : f32
    %58 = vector.broadcast %cst_14 : f32 to vector<16x1xf32>
    %59 = arith.divf %57, %58 : vector<16x1xf32>
    %60 = arith.mulf %54, %54 : vector<16x1xf32>
    %61 = arith.subf %59, %60 : vector<16x1xf32>
    %cst_15 = arith.constant 0.000000e+00 : f32
    %62 = vector.broadcast %cst_15 : f32 to vector<16x1xf32>
    %63 = arith.maximumf %61, %62 : vector<16x1xf32>
    %64 = vector.broadcast %54 : vector<16x1xf32> to vector<16x32xf32>
    %65 = arith.subf %50, %64 : vector<16x32xf32>
    %cst_16 = arith.constant 9.99999996E-13 : f32
    %66 = vector.broadcast %cst_16 : f32 to vector<16x1xf32>
    %67 = arith.addf %63, %66 : vector<16x1xf32>
    %68 = math.rsqrt %67 : vector<16x1xf32>
    %69 = vector.broadcast %68 : vector<16x1xf32> to vector<16x32xf32>
    %70 = arith.mulf %65, %69 : vector<16x32xf32>
    %71 = vector.broadcast %7 : vector<1x32xf32> to vector<16x32xf32>
    %72 = arith.mulf %70, %71 : vector<16x32xf32>
    %73 = vector.broadcast %8 : vector<1x32xf32> to vector<16x32xf32>
    %74 = arith.addf %72, %73 : vector<16x32xf32>
    %c0_17 = arith.constant 0 : index
    %c0_18 = arith.constant 0 : index
    %75 = vector.load %arg2[%c0_17, %c0_18] : memref<16x16xbf16, #tpu.memory_space<vmem>>, vector<16x16xbf16>
    %cst_19 = arith.constant dense<0.000000e+00> : vector<16x32xf32>
    %76 = tpu.matmul %75, %1, %cst_19 {dimension_numbers = #tpu.dot_dimension_numbers<[1], [0], [0], [1], [0, 0, 1, 1], [], []>} : vector<16x16xbf16>, vector<16x32xbf16>, vector<16x32xf32> -> vector<16x32xf32>
    %77 = arith.subf %0, %76 : vector<16x32xf32>
    %78 = vector.broadcast %13 : vector<1x32xf32> to vector<16x32xf32>
    %79 = arith.mulf %78, %77 : vector<16x32xf32>
    %80 = arith.addf %76, %79 : vector<16x32xf32>
    %81 = arith.addf %80, %0 : vector<16x32xf32>
    %cst_20 = arith.constant dense<0.000000e+00> : vector<16xf32>
    %82 = vector.multi_reduction <add>, %81, %cst_20 [1] : vector<16x32xf32> to vector<16xf32>
    %83 = vector.shape_cast %82 : vector<16xf32> to vector<16x1xf32>
    %cst_21 = arith.constant 3.200000e+01 : f32
    %84 = vector.broadcast %cst_21 : f32 to vector<16x1xf32>
    %85 = arith.divf %83, %84 : vector<16x1xf32>
    %86 = arith.mulf %81, %81 : vector<16x32xf32>
    %cst_22 = arith.constant dense<0.000000e+00> : vector<16xf32>
    %87 = vector.multi_reduction <add>, %86, %cst_22 [1] : vector<16x32xf32> to vector<16xf32>
    %88 = vector.shape_cast %87 : vector<16xf32> to vector<16x1xf32>
    %cst_23 = arith.constant 3.200000e+01 : f32
    %89 = vector.broadcast %cst_23 : f32 to vector<16x1xf32>
    %90 = arith.divf %88, %89 : vector<16x1xf32>
    %91 = arith.mulf %85, %85 : vector<16x1xf32>
    %92 = arith.subf %90, %91 : vector<16x1xf32>
    %cst_24 = arith.constant 0.000000e+00 : f32
    %93 = vector.broadcast %cst_24 : f32 to vector<16x1xf32>
    %94 = arith.maximumf %92, %93 : vector<16x1xf32>
    %95 = vector.broadcast %85 : vector<16x1xf32> to vector<16x32xf32>
    %96 = arith.subf %81, %95 : vector<16x32xf32>
    %cst_25 = arith.constant 9.99999996E-13 : f32
    %97 = vector.broadcast %cst_25 : f32 to vector<16x1xf32>
    %98 = arith.addf %94, %97 : vector<16x1xf32>
    %99 = math.rsqrt %98 : vector<16x1xf32>
    %100 = vector.broadcast %99 : vector<16x1xf32> to vector<16x32xf32>
    %101 = arith.mulf %96, %100 : vector<16x32xf32>
    %102 = vector.broadcast %9 : vector<1x32xf32> to vector<16x32xf32>
    %103 = arith.mulf %101, %102 : vector<16x32xf32>
    %104 = vector.broadcast %10 : vector<1x32xf32> to vector<16x32xf32>
    %105 = arith.addf %103, %104 : vector<16x32xf32>
    %cst_26 = arith.constant 0.699999988 : f32
    %106 = vector.broadcast %cst_26 : f32 to vector<16x32xf32>
    %107 = arith.mulf %106, %105 : vector<16x32xf32>
    %cst_27 = arith.constant 3.000000e-01 : f32
    %108 = vector.broadcast %cst_27 : f32 to vector<16x32xf32>
    %109 = arith.mulf %108, %74 : vector<16x32xf32>
    %110 = arith.addf %107, %109 : vector<16x32xf32>
    %111 = arith.truncf %110 : vector<16x32xf32> to vector<16x32xbf16>
    %c0_28 = arith.constant 0 : index
    %c0_29 = arith.constant 0 : index
    %112 = vector.load %arg4[%c0_28, %c0_29] : memref<32x64xbf16, #tpu.memory_space<vmem>>, vector<32x64xbf16>
    %cst_30 = arith.constant dense<0.000000e+00> : vector<16x64xf32>
    %113 = tpu.matmul %111, %112, %cst_30 {dimension_numbers = #tpu.dot_dimension_numbers<[1], [0], [0], [1], [0, 0, 1, 1], [], []>} : vector<16x32xbf16>, vector<32x64xbf16>, vector<16x64xf32> -> vector<16x64xf32>
    %114 = vector.broadcast %4 : vector<1x64xf32> to vector<16x64xf32>
    %115 = arith.addf %113, %114 : vector<16x64xf32>
    %cst_31 = arith.constant 5.000000e-01 : f32
    %116 = vector.broadcast %cst_31 : f32 to vector<16x64xf32>
    %117 = arith.mulf %116, %115 : vector<16x64xf32>
    %cst_32 = arith.constant 0.707106769 : f32
    %118 = vector.broadcast %cst_32 : f32 to vector<16x64xf32>
    %119 = arith.mulf %115, %118 : vector<16x64xf32>
    %120 = math.erf %119 : vector<16x64xf32>
    %cst_33 = arith.constant 1.000000e+00 : f32
    %121 = vector.broadcast %cst_33 : f32 to vector<16x64xf32>
    %122 = arith.addf %121, %120 : vector<16x64xf32>
    %123 = arith.mulf %117, %122 : vector<16x64xf32>
    %124 = arith.truncf %123 : vector<16x64xf32> to vector<16x64xbf16>
    %c0_34 = arith.constant 0 : index
    %c0_35 = arith.constant 0 : index
    %125 = vector.load %arg5[%c0_34, %c0_35] : memref<64x32xbf16, #tpu.memory_space<vmem>>, vector<64x32xbf16>
    %cst_36 = arith.constant dense<0.000000e+00> : vector<16x32xf32>
    %126 = tpu.matmul %124, %125, %cst_36 {dimension_numbers = #tpu.dot_dimension_numbers<[1], [0], [0], [1], [0, 0, 1, 1], [], []>} : vector<16x64xbf16>, vector<64x32xbf16>, vector<16x32xf32> -> vector<16x32xf32>
    %127 = vector.broadcast %6 : vector<1x32xf32> to vector<16x32xf32>
    %128 = arith.addf %126, %127 : vector<16x32xf32>
    %129 = arith.addf %128, %110 : vector<16x32xf32>
    %cst_37 = arith.constant dense<0.000000e+00> : vector<16xf32>
    %130 = vector.multi_reduction <add>, %129, %cst_37 [1] : vector<16x32xf32> to vector<16xf32>
    %131 = vector.shape_cast %130 : vector<16xf32> to vector<16x1xf32>
    %cst_38 = arith.constant 3.200000e+01 : f32
    %132 = vector.broadcast %cst_38 : f32 to vector<16x1xf32>
    %133 = arith.divf %131, %132 : vector<16x1xf32>
    %134 = arith.mulf %129, %129 : vector<16x32xf32>
    %cst_39 = arith.constant dense<0.000000e+00> : vector<16xf32>
    %135 = vector.multi_reduction <add>, %134, %cst_39 [1] : vector<16x32xf32> to vector<16xf32>
    %136 = vector.shape_cast %135 : vector<16xf32> to vector<16x1xf32>
    %cst_40 = arith.constant 3.200000e+01 : f32
    %137 = vector.broadcast %cst_40 : f32 to vector<16x1xf32>
    %138 = arith.divf %136, %137 : vector<16x1xf32>
    %139 = arith.mulf %133, %133 : vector<16x1xf32>
    %140 = arith.subf %138, %139 : vector<16x1xf32>
    %cst_41 = arith.constant 0.000000e+00 : f32
    %141 = vector.broadcast %cst_41 : f32 to vector<16x1xf32>
    %142 = arith.maximumf %140, %141 : vector<16x1xf32>
    %143 = vector.broadcast %133 : vector<16x1xf32> to vector<16x32xf32>
    %144 = arith.subf %129, %143 : vector<16x32xf32>
    %cst_42 = arith.constant 9.99999996E-13 : f32
    %145 = vector.broadcast %cst_42 : f32 to vector<16x1xf32>
    %146 = arith.addf %142, %145 : vector<16x1xf32>
    %147 = math.rsqrt %146 : vector<16x1xf32>
    %148 = vector.broadcast %147 : vector<16x1xf32> to vector<16x32xf32>
    %149 = arith.mulf %144, %148 : vector<16x32xf32>
    %150 = vector.broadcast %11 : vector<1x32xf32> to vector<16x32xf32>
    %151 = arith.mulf %149, %150 : vector<16x32xf32>
    %152 = vector.broadcast %12 : vector<1x32xf32> to vector<16x32xf32>
    %153 = arith.addf %151, %152 : vector<16x32xf32>
    %c0_43 = arith.constant 0 : index
    %c0_44 = arith.constant 0 : index
    %154 = vector.load %arg7[%c0_43, %c0_44] : memref<16x32xf32, #tpu.memory_space<vmem>>, vector<16x32xf32>
    tpu.vector_store %arg7[%c0_43, %c0_44], %153 {strides = array<i32>} : memref<16x32xf32, #tpu.memory_space<vmem>>, vector<16x32xf32>,
    return
  }
}

</mosaic_0001>

<llo_original>
// kernel: bsarec_block.1
$region0: #{bsarec_block.1}
  #allocation0 [shape = 'u32[]', space=smem, size = 0x4, offset = 0x4, fixed_abs, tag = 'smem constant byte address 0x4 - core index']
  #allocation1 [shape = 'u32[144,128]{1,0:T(1,128)}', space=vmem, size = 0x12000, scoped, tag = 'internal scratch']
  %s0 = inlined_call_operand.vmem [shape: f32[16,32], index: 0, kind: input, shape index: {}]
  %s1 = inlined_call_operand.vmem [shape: f32[32,32], index: 1, kind: input, shape index: {}]
  %s2 = inlined_call_operand.hbm [shape: bf16[16,16], index: 2, kind: input, shape index: {}]
  %s3 = inlined_call_operand.hbm [shape: bf16[32,128], index: 3, kind: input, shape index: {}]
  %s4 = inlined_call_operand.hbm [shape: bf16[32,64], index: 4, kind: input, shape index: {}]
  %s5 = inlined_call_operand.vmem [shape: bf16[64,32], index: 5, kind: input, shape index: {}]
  %s6 = inlined_call_operand.hbm [shape: f32[11,128], index: 6, kind: input, shape index: {}]
  %s7 = inlined_call_operand.hbm [shape: f32[16,32], index: 7, kind: output, shape index: {}]
  %s8 = sld [smem:[#allocation0]]
  $region54: #{bsarec_block.1} parent=0
    _
  %s10 = ssub.s32 1, %s8
  %s11 = scalar_select 0, %s10, %s8
  $region1: #{bsarec_block.1} parent=0
    #allocation2 [shape = 'u8[4096]{0}', space=vmem, size = 0x1000, scoped, tag = 'input window, operand 2, single buffered']
    #allocation3 [shape = 's32[1]{0}', space=sflag, size = 0x4, scoped, tag = 'scoped memory for bsarec_block.1']
    #allocation4 [shape = 's32[1]{0}', space=sflag, size = 0x4, scoped, tag = 'scoped memory for bsarec_block.1']
    #allocation5 [shape = 'u8[8192]{0}', space=vmem, size = 0x2000, scoped, tag = 'input window, operand 3, single buffered']
    #allocation6 [shape = 's32[1]{0}', space=sflag, size = 0x4, scoped, tag = 'scoped memory for bsarec_block.1']
    #allocation7 [shape = 'u8[8192]{0}', space=vmem, size = 0x2000, scoped, tag = 'input window, operand 4, single buffered']
    #allocation8 [shape = 'u8[8192]{0}', space=vmem, size = 0x2000, scoped, tag = 'input window, operand 6, single buffered']
    #allocation9 [shape = 's32[1]{0}', space=sflag, size = 0x4, scoped, tag = 'scoped memory for bsarec_block.1']
    #allocation10 [shape = 'u8[8192]{0}', space=vmem, size = 0x2000, scoped, tag = 'output window, operand 0, single buffered']
    %12 = vsyncpa [#allocation3], 0
    %13 = vsyncpa [#allocation6], 0
    %14 = vsyncpa [#allocation9], 0
    %15 = vsyncpa [#allocation4], 0
    // Predicated region
    $region2: #{bsarec_block.1} parent=1 // pred_check
      _
    $region3: #{bsarec_block.1} parent=1 // pred_check_branch
      %17 = sbr.rel (0) target = $region5
    $region4: #{bsarec_block.1} parent=1 // pred_region
      _
    $region5: #{bsarec_block.1} parent=1 // pred_fallthru
      _
    // Predicated region
    $region6: #{bsarec_block.1} parent=1 // pred_check
      _
    $region7: #{bsarec_block.1} parent=1 // pred_check_branch
      %19 = sbr.rel (0) target = $region9
    $region8: #{bsarec_block.1} parent=1 // pred_region
      _
    $region9: #{bsarec_block.1} parent=1 // pred_fallthru
      _
    // Predicated region
    $region10: #{bsarec_block.1} parent=1 // pred_check
      _
    $region11: #{bsarec_block.1} parent=1 // pred_check_branch
      %21 = sbr.rel (0) target = $region13
    $region12: #{bsarec_block.1} parent=1 // pred_region
      %s23 = ssub.s32 128, 128
      %24 = vsyncadd [#allocation3], %s23
      %s25 = sshll.u32 [#allocation2], 4
      %s26 = int_to_ptr.vmem [resolvable:$true] %s25
      %31 = dma.hbm_to_vmem [thread:$0]  %s2, 128, %s26, [#allocation3], 64, 64, 4
    $region13: #{bsarec_block.1} parent=1 // pred_fallthru
      _
    // Predicated region
    $region14: #{bsarec_block.1} parent=1 // pred_check
      _
    $region15: #{bsarec_block.1} parent=1 // pred_check_branch
      %33 = sbr.rel (0) target = $region17
    $region16: #{bsarec_block.1} parent=1 // pred_region
      %s35 = ssub.s32 256, 256
      %36 = vsyncadd [#allocation6], %s35
      %s37 = sshll.u32 [#allocation5], 4
      %s38 = int_to_ptr.vmem [resolvable:$true] %s37
      %43 = dma.hbm_to_vmem [thread:$0]  %s3, 256, %s38, [#allocation6], 64, 64, 4
    $region17: #{bsarec_block.1} parent=1 // pred_fallthru
      _
    // Predicated region
    $region18: #{bsarec_block.1} parent=1 // pred_check
      _
    $region19: #{bsarec_block.1} parent=1 // pred_check_branch
      %45 = sbr.rel (0) target = $region21
    $region20: #{bsarec_block.1} parent=1 // pred_region
      %s47 = ssub.s32 256, 256
      %48 = vsyncadd [#allocation6], %s47
      %s49 = sshll.u32 [#allocation7], 4
      %s50 = int_to_ptr.vmem [resolvable:$true] %s49
      %55 = dma.hbm_to_vmem [thread:$0]  %s4, 256, %s50, [#allocation6], 64, 64, 4
    $region21: #{bsarec_block.1} parent=1 // pred_fallthru
      _
    // Predicated region
    $region22: #{bsarec_block.1} parent=1 // pred_check
      _
    $region23: #{bsarec_block.1} parent=1 // pred_check_branch
      %57 = sbr.rel (0) target = $region25
    $region24: #{bsarec_block.1} parent=1 // pred_region
      _
    $region25: #{bsarec_block.1} parent=1 // pred_fallthru
      _
    // Predicated region
    $region26: #{bsarec_block.1} parent=1 // pred_check
      _
    $region27: #{bsarec_block.1} parent=1 // pred_check_branch
      %59 = sbr.rel (0) target = $region29
    $region28: #{bsarec_block.1} parent=1 // pred_region
      %s61 = ssub.s32 256, 256
      %62 = vsyncadd [#allocation9], %s61
      %s63 = sshll.u32 [#allocation8], 4
      %s64 = int_to_ptr.vmem [resolvable:$true] %s63
      %69 = dma.hbm_to_vmem [thread:$0]  %s6, 256, %s64, [#allocation9], 128, 128, 8
    $region29: #{bsarec_block.1} parent=1 // pred_fallthru
      _
    // Predicated region
    $region30: #{bsarec_block.1} parent=1 // pred_check
      _
    $region31: #{bsarec_block.1} parent=1 // pred_check_branch
      %71 = sbr.rel (0) target = $region33
    $region32: #{bsarec_block.1} parent=1 // pred_region
      %72 = dma.done [#allocation3], 128
    $region33: #{bsarec_block.1} parent=1 // pred_fallthru
      _
    // Predicated region
    $region34: #{bsarec_block.1} parent=1 // pred_check
      _
    $region35: #{bsarec_block.1} parent=1 // pred_check_branch
      %74 = sbr.rel (0) target = $region37
    $region36: #{bsarec_block.1} parent=1 // pred_region
      %75 = dma.done [#allocation6], 256
    $region37: #{bsarec_block.1} parent=1 // pred_fallthru
      _
    // Predicated region
    $region38: #{bsarec_block.1} parent=1 // pred_check
      _
    $region39: #{bsarec_block.1} parent=1 // pred_check_branch
      %77 = sbr.rel (0) target = $region41
    $region40: #{bsarec_block.1} parent=1 // pred_region
      %78 = dma.done [#allocation6], 256
    $region41: #{bsarec_block.1} parent=1 // pred_fallthru
      _
    // Predicated region
    $region42: #{bsarec_block.1} parent=1 // pred_check
      _
    $region43: #{bsarec_block.1} parent=1 // pred_check_branch
      %80 = sbr.rel (0) target = $region45
    $region44: #{bsarec_block.1} parent=1 // pred_region
      %81 = dma.done [#allocation9], 256
    $region45: #{bsarec_block.1} parent=1 // pred_fallthru
      _
    %v83 = vld [vmem:[%s0] sm:$0xff]
    %v84 = vld [vmem:[%s0 + $0x8] sm:$0xff]
    %v85 = vpack.c.bf16 %v84, %v83
    %v86 = vld [vmem:[#allocation8] sm:$0xff]
    %v87 = vld [vmem:[#allocation8 + $0x8] sm:$0x7]
    %v88 = vld [vmem:[#allocation5] sm:$0xf]
    %v89 = vld [vmem:[#allocation5 + $0x4] sm:$0xf]
    %v90 = vld [vmem:[#allocation5 + $0x8] sm:$0xf]
    %v91 = vld [vmem:[#allocation5 + $0xc] sm:$0xf]
    %v92 = vlaneseq
    %v93 = vshrl.u32 %v92, 7
    %v94 = vsub.s32 0, %v93
    %v95 = vrot.slane %v86, %v94
    %v100 = vunpack.c.l.b16 %v88
    %v101 = vunpack.c.l.b16 %v89
    %v102 = vunpack.c.l.b16 %v90
    %v103 = vunpack.c.l.b16 %v91
    %v104 = vpack.c.b16 %v101, %v100
    %v105 = vpack.c.b16 %v103, %v102
    %vm108 = vcmask 261120
    %v110 = vsel %vm108, %v85, 0
    %112 = vmatprep.subr.bf16.mxu0 0
    %113 = vmatpush1.bf16.msra.mxu0 0
    %114 = vmatprep.subr.bf16.mxu0 0
    %115 = vmatpush1.bf16.msra.mxu0 0
    %116 = vmatprep.subr.bf16.mxu0 0
    %117 = vmatpush1.bf16.msra.mxu0 0
    %118 = vmatprep.subr.bf16.mxu0 0
    %119 = vmatpush1.bf16.msra.mxu0 0
    %120 = vmatprep.subr.bf16.mxu0 0
    %121 = vmatpush1.bf16.msra.mxu0 0
    %122 = vmatprep.subr.bf16.mxu0 0
    %123 = vmatpush1.bf16.msra.mxu0 0
    %124 = vmatprep.subr.bf16.mxu0 0
    %125 = vmatpush1.bf16.msra.mxu0 %v105
    %126 = vmatprep.subr.bf16.mxu0 0
    %127 = vmatpush1.bf16.msra.mxu0 %v104
    %128 = vmatprep.subr.bf16.mxu0 0
    %129 = vmatpush2.bf16.msra.mxu0 0
    %130 = vmatprep.subr.bf16.mxu0 0
    %131 = vmatpush2.bf16.msra.mxu0 0
    %132 = vmatprep.subr.bf16.mxu0 0
    %133 = vmatpush2.bf16.msra.mxu0 0
    %134 = vmatprep.subr.bf16.mxu0 0
    %135 = vmatpush2.bf16.msra.mxu0 0
    %136 = vmatprep.subr.bf16.mxu0 0
    %137 = vmatpush2.bf16.msra.mxu0 0
    %138 = vmatprep.subr.bf16.mxu0 0
    %139 = vmatpush2.bf16.msra.mxu0 0
    %140 = vmatprep.subr.bf16.mxu0 0
    %141 = vmatpush2.bf16.msra.mxu0 0
    %142 = vmatprep.subr.bf16.mxu0 0
    %143 = vmatpush2.bf16.msra.mxu0 0
    %144 = vmatprep.mubr.bf16.mxu0 0
    %145 = vmatmul.mubr.bf16.gmra.mxu0 %v110
    %v146 = vpop.f32.mrf.mxu0
    %v147 = vadd.f32 %v95, %v146
    %v148 = vpop.f32.mrf.mxu0
    %v149 = vpop.f32.mrf.mxu0
    %v150 = vadd.f32 %v95, %v149
    %v151 = vpop.f32.mrf.mxu0
    %152 = vdwg.mxu0
    %155 = vrot.lane.b32.xlu0 %v147, 112
    %v156 = vpop.permute.xlu0 %155
    %157 = vrot.lane.b32.xlu0 %v150, 112
    %v158 = vpop.permute.xlu0 %157
    %v161 = vpack.c.bf16 %v150, %v147
    %v162 = vpack.c.bf16 %v158, %v156
    %163 = vrot.lane.b32.xlu0 %v147, 96
    %v164 = vpop.permute.xlu0 %163
    %165 = vrot.lane.b32.xlu0 %v150, 96
    %v166 = vpop.permute.xlu0 %165
    %v169 = vpack.c.bf16 %v166, %v164
    %v170 = vld [vmem:[%s1] sm:$0xff]
    %v171 = vld [vmem:[%s1 + $0x8] sm:$0xff]
    %v172 = vld [vmem:[%s1 + $0x10] sm:$0xff]
    %v173 = vld [vmem:[%s1 + $0x18] sm:$0xff]
    %176 = vrot.lane.b32.xlu0 %v161, 96
    %v177 = vpop.permute.xlu0 %176
    %178 = vrot.lane.b32.xlu0 %v162, 96
    %v179 = vpop.permute.xlu0 %178
    %vm180 = vcmask 130048
    %v182 = vsel %vm180, %v161, 0
    %v185 = vsel %vm180, %v162, 0
    %v188 = vsel %vm180, %v177, 0
    %v191 = vsel %vm180, %v179, 0
    %193 = vmatprep.subr.bf16.mxu0 0
    %194 = vmatpush1.bf16.xpose.msra.mxu0 0
    %195 = vmatprep.subr.bf16.mxu0 0
    %196 = vmatpush1.bf16.xpose.msra.mxu0 0
    %197 = vmatprep.subr.bf16.mxu0 0
    %198 = vmatpush1.bf16.xpose.msra.mxu0 0
    %199 = vmatprep.subr.bf16.mxu0 0
    %200 = vmatpush1.bf16.xpose.msra.mxu0 0
    %201 = vmatprep.subr.bf16.mxu0 0
    %202 = vmatpush1.bf16.xpose.msra.mxu0 0
    %203 = vmatprep.subr.bf16.mxu0 0
    %204 = vmatpush1.bf16.xpose.msra.mxu0 0
    %205 = vmatprep.subr.bf16.mxu0 0
    %206 = vmatpush1.bf16.xpose.msra.mxu0 %v191
    %207 = vmatprep.subr.bf16.mxu0 0
    %208 = vmatpush1.bf16.xpose.msra.mxu0 %v188
    %209 = vmatprep.subr.bf16.mxu0 0
    %210 = vmatpush2.bf16.xpose.msra.mxu0 0
    %211 = vmatprep.subr.bf16.mxu0 0
    %212 = vmatpush2.bf16.xpose.msra.mxu0 0
    %213 = vmatprep.subr.bf16.mxu0 0
    %214 = vmatpush2.bf16.xpose.msra.mxu0 0
    %215 = vmatprep.subr.bf16.mxu0 0
    %216 = vmatpush2.bf16.xpose.msra.mxu0 0
    %217 = vmatprep.subr.bf16.mxu0 0
    %218 = vmatpush2.bf16.xpose.msra.mxu0 0
    %219 = vmatprep.subr.bf16.mxu0 0
    %220 = vmatpush2.bf16.xpose.msra.mxu0 0
    %221 = vmatprep.subr.bf16.mxu0 0
    %222 = vmatpush2.bf16.xpose.msra.mxu0 0
    %223 = vmatprep.subr.bf16.mxu0 0
    %224 = vmatpush2.bf16.xpose.msra.mxu0 0
    %225 = vmatprep.mubr.bf16.mxu0 0
    %226 = vmatmul.mubr.bf16.gmra.mxu0 %v182
    %v227 = vpop.f32.mrf.mxu0
    %v228 = vadd.f32 %v170, %v227
    %v229 = vpop.f32.mrf.mxu0
    %v230 = vpop.f32.mrf.mxu0
    %v231 = vadd.f32 %v171, %v230
    %v232 = vpop.f32.mrf.mxu0
    %233 = vmatprep.mubr.bf16.mxu0 0
    %234 = vmatmul.mubr.bf16.gmra.mxu0 %v185
    %v235 = vpop.f32.mrf.mxu0
    %v236 = vadd.f32 %v172, %v235
    %v237 = vpop.f32.mrf.mxu0
    %v238 = vpop.f32.mrf.mxu0
    %v239 = vadd.f32 %v173, %v238
    %v240 = vpop.f32.mrf.mxu0
    %241 = vdwg.mxu0
    %v242 = vsel %vm108, %v228, -inf
    %243 = vmax.xlane.f32.xlu0 %v242
    %v244 = vpop.xlane.xlu0 %243
    %v245 = vsel %vm108, %v231, -inf
    %246 = vmax.xlane.f32.xlu0 %v245
    %v247 = vpop.xlane.xlu0 %246
    %v248 = vsel %vm108, %v236, -inf
    %249 = vmax.xlane.f32.xlu0 %v248
    %v250 = vpop.xlane.xlu0 %249
    %v251 = vsel %vm108, %v239, -inf
    %252 = vmax.xlane.f32.xlu0 %v251
    %v253 = vpop.xlane.xlu0 %252
    %v254 = vsub.f32 %v228, %v244
    %v255 = vsub.f32 %v231, %v247
    %v256 = vsub.f32 %v236, %v250
    %v257 = vsub.f32 %v239, %v253
    %v258 = vmul.f32 %v254, 1.442695
    %v259 = vpow.pop %v258
    %v260 = vmul.f32 %v255, 1.442695
    %v261 = vpow.pop %v260
    %v262 = vmul.f32 %v256, 1.442695
    %v263 = vpow.pop %v262
    %v264 = vmul.f32 %v257, 1.442695
    %v265 = vpow.pop %v264
    %v266 = vsel %vm108, %v259, 0.0
    %267 = vadd.xlane.f32.xlu0 %v266
    %v268 = vpop.xlane.xlu0 %267
    %v269 = vsel %vm108, %v261, 0.0
    %270 = vadd.xlane.f32.xlu0 %v269
    %v271 = vpop.xlane.xlu0 %270
    %v272 = vsel %vm108, %v263, 0.0
    %273 = vadd.xlane.f32.xlu0 %v272
    %v274 = vpop.xlane.xlu0 %273
    %v275 = vsel %vm108, %v265, 0.0
    %276 = vadd.xlane.f32.xlu0 %v275
    %v277 = vpop.xlane.xlu0 %276
    %v278 = vrcp.pop %v268
    %v279 = vrcp.pop %v271
    %v280 = vrcp.pop %v274
    %v281 = vrcp.pop %v277
    %v282 = vmul.f32 %v259, %v278
    %v283 = vmul.f32 %v261, %v279
    %v284 = vmul.f32 %v263, %v280
    %v285 = vmul.f32 %v265, %v281
    %v286 = vpack.c.bf16 %v283, %v282
    %v287 = vpack.c.bf16 %v285, %v284
    %289 = vrot.lane.b32.xlu0 %v161, 64
    %v290 = vpop.permute.xlu0 %289
    %291 = vrot.lane.b32.xlu0 %v169, 64
    %v292 = vpop.permute.xlu0 %291
    %v296 = vsel %vm108, %v286, 0
    %v299 = vsel %vm108, %v287, 0
    %301 = vmatprep.subr.bf16.mxu0 0
    %302 = vmatpush1.bf16.msra.mxu0 0
    %303 = vmatprep.subr.bf16.mxu0 0
    %304 = vmatpush1.bf16.msra.mxu0 0
    %305 = vmatprep.subr.bf16.mxu0 0
    %306 = vmatpush1.bf16.msra.mxu0 0
    %307 = vmatprep.subr.bf16.mxu0 0
    %308 = vmatpush1.bf16.msra.mxu0 0
    %309 = vmatprep.subr.bf16.mxu0 0
    %310 = vmatpush1.bf16.msra.mxu0 0
    %311 = vmatprep.subr.bf16.mxu0 0
    %312 = vmatpush1.bf16.msra.mxu0 0
    %313 = vmatprep.subr.bf16.mxu0 0
    %314 = vmatpush1.bf16.msra.mxu0 %v292
    %315 = vmatprep.subr.bf16.mxu0 0
    %316 = vmatpush1.bf16.msra.mxu0 %v290
    %317 = vmatprep.subr.bf16.mxu0 0
    %318 = vmatpush2.bf16.msra.mxu0 0
    %319 = vmatprep.subr.bf16.mxu0 0
    %320 = vmatpush2.bf16.msra.mxu0 0
    %321 = vmatprep.subr.bf16.mxu0 0
    %322 = vmatpush2.bf16.msra.mxu0 0
    %323 = vmatprep.subr.bf16.mxu0 0
    %324 = vmatpush2.bf16.msra.mxu0 0
    %325 = vmatprep.subr.bf16.mxu0 0
    %326 = vmatpush2.bf16.msra.mxu0 0
    %327 = vmatprep.subr.bf16.mxu0 0
    %328 = vmatpush2.bf16.msra.mxu0 0
    %329 = vmatprep.subr.bf16.mxu0 0
    %330 = vmatpush2.bf16.msra.mxu0 0
    %331 = vmatprep.subr.bf16.mxu0 0
    %332 = vmatpush2.bf16.msra.mxu0 0
    %333 = vmatprep.mubr.bf16.mxu0 0
    %334 = vmatmul.mubr.bf16.gmra.mxu0 %v296
    %v335 = vpop.f32.mrf.mxu0
    %v336 = vadd.f32 0.0, %v335
    %v337 = vpop.f32.mrf.mxu0
    %v338 = vpop.f32.mrf.mxu0
    %v339 = vadd.f32 0.0, %v338
    %v340 = vpop.f32.mrf.mxu0
    %341 = vmatprep.mubr.bf16.mxu0 0
    %342 = vmatmul.mubr.bf16.gmra.mxu0 %v299
    %v343 = vpop.f32.mrf.mxu0
    %v344 = vadd.f32 0.0, %v343
    %v345 = vpop.f32.mrf.mxu0
    %v346 = vpop.f32.mrf.mxu0
    %v347 = vadd.f32 0.0, %v346
    %v348 = vpop.f32.mrf.mxu0
    %349 = vdwg.mxu0
    %v350 = vadd.f32 %v336, %v344
    %v351 = vadd.f32 %v339, %v347
    %v352 = vlaneseq
    %v353 = vshrl.u32 %v352, 7
    %v354 = vsub.s32 2, %v353
    %v355 = vrot.slane %v86, %v354
    %v356 = vadd.f32 %v350, %v355
    %v357 = vadd.f32 %v351, %v355
    %v358 = vadd.f32 %v356, %v83
    %v359 = vadd.f32 %v357, %v84
    %v360 = vsel %vm108, %v358, 0.0
    %361 = vadd.xlane.f32.xlu0 %v360
    %v362 = vpop.xlane.xlu0 %361
    %v363 = vsel %vm108, %v359, 0.0
    %364 = vadd.xlane.f32.xlu0 %v363
    %v365 = vpop.xlane.xlu0 %364
    %v366 = vrcp.pop 32.0
    %v367 = vmul.f32 %v362, %v366
    %v368 = vmul.f32 %v365, %v366
    %v369 = vmul.f32 %v358, %v358
    %v370 = vmul.f32 %v359, %v359
    %v371 = vsel %vm108, %v369, 0.0
    %372 = vadd.xlane.f32.xlu0 %v371
    %v373 = vpop.xlane.xlu0 %372
    %v374 = vsel %vm108, %v370, 0.0
    %375 = vadd.xlane.f32.xlu0 %v374
    %v376 = vpop.xlane.xlu0 %375
    %v377 = vmul.f32 %v373, %v366
    %v378 = vmul.f32 %v376, %v366
    %v379 = vmul.f32 %v367, %v367
    %v380 = vmul.f32 %v368, %v368
    %v381 = vsub.f32 %v377, %v379
    %v382 = vsub.f32 %v378, %v380
    %v383 = vmax.f32 %v381, 0.0
    %v384 = vmax.f32 %v382, 0.0
    %v385 = vsub.f32 %v358, %v367
    %v386 = vsub.f32 %v359, %v368
    %v387 = vadd.f32 %v383, 1e-12
    %v388 = vadd.f32 %v384, 1e-12
    %v389 = vrsqrt.pop %v387
    %v390 = vrsqrt.pop %v388
    %v391 = vmul.f32 %v385, %v389
    %v392 = vmul.f32 %v386, %v390
    %v393 = vlaneseq
    %v394 = vshrl.u32 %v393, 7
    %v395 = vsub.s32 4, %v394
    %v396 = vrot.slane %v86, %v395
    %v397 = vmul.f32 %v391, %v396
    %v398 = vmul.f32 %v392, %v396
    %v399 = vlaneseq
    %v400 = vshrl.u32 %v399, 7
    %v401 = vsub.s32 5, %v400
    %v402 = vrot.slane %v86, %v401
    %v403 = vadd.f32 %v397, %v402
    %v404 = vadd.f32 %v398, %v402
    %v405 = vld [vmem:[#allocation2] sm:$0xf]
    %v406 = vld [vmem:[#allocation2 + $0x4] sm:$0xf]
    %v409 = vunpack.c.l.b16 %v405
    %v410 = vunpack.c.l.b16 %v406
    %v411 = vpack.c.b16 %v410, %v409
    %v413 = vsel %vm180, %v411, 0
    %415 = vmatprep.subr.bf16.mxu0 0
    %416 = vmatpush1.bf16.msra.mxu0 0
    %417 = vmatprep.subr.bf16.mxu0 0
    %418 = vmatpush1.bf16.msra.mxu0 0
    %419 = vmatprep.subr.bf16.mxu0 0
    %420 = vmatpush1.bf16.msra.mxu0 0
    %421 = vmatprep.subr.bf16.mxu0 0
    %422 = vmatpush1.bf16.msra.mxu0 0
    %423 = vmatprep.subr.bf16.mxu0 0
    %424 = vmatpush1.bf16.msra.mxu0 0
    %425 = vmatprep.subr.bf16.mxu0 0
    %426 = vmatpush1.bf16.msra.mxu0 0
    %427 = vmatprep.subr.bf16.mxu0 0
    %428 = vmatpush1.bf16.msra.mxu0 0
    %429 = vmatprep.subr.bf16.mxu0 0
    %430 = vmatpush1.bf16.msra.mxu0 %v85
    %431 = vmatprep.subr.bf16.mxu0 0
    %432 = vmatpush2.bf16.msra.mxu0 0
    %433 = vmatprep.subr.bf16.mxu0 0
    %434 = vmatpush2.bf16.msra.mxu0 0
    %435 = vmatprep.subr.bf16.mxu0 0
    %436 = vmatpush2.bf16.msra.mxu0 0
    %437 = vmatprep.subr.bf16.mxu0 0
    %438 = vmatpush2.bf16.msra.mxu0 0
    %439 = vmatprep.subr.bf16.mxu0 0
    %440 = vmatpush2.bf16.msra.mxu0 0
    %441 = vmatprep.subr.bf16.mxu0 0
    %442 = vmatpush2.bf16.msra.mxu0 0
    %443 = vmatprep.subr.bf16.mxu0 0
    %444 = vmatpush2.bf16.msra.mxu0 0
    %445 = vmatprep.subr.bf16.mxu0 0
    %446 = vmatpush2.bf16.msra.mxu0 0
    %447 = vmatprep.mubr.bf16.mxu0 0
    %448 = vmatmul.mubr.bf16.gmra.mxu0 %v413
    %v449 = vpop.f32.mrf.mxu0
    %v450 = vadd.f32 0.0, %v449
    %v451 = vpop.f32.mrf.mxu0
    %v452 = vpop.f32.mrf.mxu0
    %v453 = vadd.f32 0.0, %v452
    %v454 = vpop.f32.mrf.mxu0
    %455 = vdwg.mxu0
    %v456 = vsub.f32 %v83, %v450
    %v457 = vsub.f32 %v84, %v453
    %v458 = vlaneseq
    %v459 = vshrl.u32 %v458, 7
    %v460 = vsub.s32 2, %v459
    %v461 = vrot.slane %v87, %v460
    %v462 = vmul.f32 %v461, %v456
    %v463 = vmul.f32 %v461, %v457
    %v464 = vadd.f32 %v450, %v462
    %v465 = vadd.f32 %v453, %v463
    %v466 = vadd.f32 %v464, %v83
    %v467 = vadd.f32 %v465, %v84
    %v468 = vsel %vm108, %v466, 0.0
    %469 = vadd.xlane.f32.xlu0 %v468
    %v470 = vpop.xlane.xlu0 %469
    %v471 = vsel %vm108, %v467, 0.0
    %472 = vadd.xlane.f32.xlu0 %v471
    %v473 = vpop.xlane.xlu0 %472
    %v474 = vmul.f32 %v470, %v366
    %v475 = vmul.f32 %v473, %v366
    %v476 = vmul.f32 %v466, %v466
    %v477 = vmul.f32 %v467, %v467
    %v478 = vsel %vm108, %v476, 0.0
    %479 = vadd.xlane.f32.xlu0 %v478
    %v480 = vpop.xlane.xlu0 %479
    %v481 = vsel %vm108, %v477, 0.0
    %482 = vadd.xlane.f32.xlu0 %v481
    %v483 = vpop.xlane.xlu0 %482
    %v484 = vmul.f32 %v480, %v366
    %v485 = vmul.f32 %v483, %v366
    %v486 = vmul.f32 %v474, %v474
    %v487 = vmul.f32 %v475, %v475
    %v488 = vsub.f32 %v484, %v486
    %v489 = vsub.f32 %v485, %v487
    %v490 = vmax.f32 %v488, 0.0
    %v491 = vmax.f32 %v489, 0.0
    %v492 = vsub.f32 %v466, %v474
    %v493 = vsub.f32 %v467, %v475
    %v494 = vadd.f32 %v490, 1e-12
    %v495 = vadd.f32 %v491, 1e-12
    %v496 = vrsqrt.pop %v494
    %v497 = vrsqrt.pop %v495
    %v498 = vmul.f32 %v492, %v496
    %v499 = vmul.f32 %v493, %v497
    %v500 = vlaneseq
    %v501 = vshrl.u32 %v500, 7
    %v502 = vsub.s32 6, %v501
    %v503 = vrot.slane %v86, %v502
    %v504 = vmul.f32 %v498, %v503
    %v505 = vmul.f32 %v499, %v503
    %v506 = vlaneseq
    %v507 = vshrl.u32 %v506, 7
    %v508 = vsub.s32 7, %v507
    %v509 = vrot.slane %v86, %v508
    %v510 = vadd.f32 %v504, %v509
    %v511 = vadd.f32 %v505, %v509
    %v512 = vmul.f32 %v510, 0.7
    %v513 = vmul.f32 %v511, 0.7
    %v514 = vmul.f32 %v403, 0.3
    %v515 = vmul.f32 %v404, 0.3
    %v516 = vadd.f32 %v512, %v514
    %v517 = vadd.f32 %v513, %v515
    %v518 = vpack.c.bf16 %v517, %v516
    %v519 = vld [vmem:[#allocation7] sm:$0xf]
    %v520 = vld [vmem:[#allocation7 + $0x4] sm:$0xf]
    %v521 = vld [vmem:[#allocation7 + $0x8] sm:$0xf]
    %v522 = vld [vmem:[#allocation7 + $0xc] sm:$0xf]
    %v523 = vlaneseq
    %v524 = vshrl.u32 %v523, 7
    %v525 = vsub.s32 1, %v524
    %v526 = vrot.slane %v86, %v525
    %v531 = vunpack.c.l.b16 %v519
    %v532 = vunpack.c.l.b16 %v520
    %v533 = vunpack.c.l.b16 %v521
    %v534 = vunpack.c.l.b16 %v522
    %v535 = vpack.c.b16 %v532, %v531
    %v536 = vpack.c.b16 %v534, %v533
    %v540 = vsel %vm108, %v518, 0
    %542 = vmatprep.subr.bf16.mxu0 0
    %543 = vmatpush1.bf16.msra.mxu0 0
    %544 = vmatprep.subr.bf16.mxu0 0
    %545 = vmatpush1.bf16.msra.mxu0 0
    %546 = vmatprep.subr.bf16.mxu0 0
    %547 = vmatpush1.bf16.msra.mxu0 0
    %548 = vmatprep.subr.bf16.mxu0 0
    %549 = vmatpush1.bf16.msra.mxu0 0
    %550 = vmatprep.subr.bf16.mxu0 0
    %551 = vmatpush1.bf16.msra.mxu0 0
    %552 = vmatprep.subr.bf16.mxu0 0
    %553 = vmatpush1.bf16.msra.mxu0 0
    %554 = vmatprep.subr.bf16.mxu0 0
    %555 = vmatpush1.bf16.msra.mxu0 %v536
    %556 = vmatprep.subr.bf16.mxu0 0
    %557 = vmatpush1.bf16.msra.mxu0 %v535
    %558 = vmatprep.subr.bf16.mxu0 0
    %559 = vmatpush2.bf16.msra.mxu0 0
    %560 = vmatprep.subr.bf16.mxu0 0
    %561 = vmatpush2.bf16.msra.mxu0 0
    %562 = vmatprep.subr.bf16.mxu0 0
    %563 = vmatpush2.bf16.msra.mxu0 0
    %564 = vmatprep.subr.bf16.mxu0 0
    %565 = vmatpush2.bf16.msra.mxu0 0
    %566 = vmatprep.subr.bf16.mxu0 0
    %567 = vmatpush2.bf16.msra.mxu0 0
    %568 = vmatprep.subr.bf16.mxu0 0
    %569 = vmatpush2.bf16.msra.mxu0 0
    %570 = vmatprep.subr.bf16.mxu0 0
    %571 = vmatpush2.bf16.msra.mxu0 0
    %572 = vmatprep.subr.bf16.mxu0 0
    %573 = vmatpush2.bf16.msra.mxu0 0
    %574 = vmatprep.mubr.bf16.mxu0 0
    %575 = vmatmul.mubr.bf16.gmra.mxu0 %v540
    %v576 = vpop.f32.mrf.mxu0
    %v577 = vadd.f32 %v526, %v576
    %v578 = vpop.f32.mrf.mxu0
    %v579 = vpop.f32.mrf.mxu0
    %v580 = vadd.f32 %v526, %v579
    %v581 = vpop.f32.mrf.mxu0
    %582 = vdwg.mxu0
    %v583 = vmul.f32 %v577, 0.5
    %v584 = vmul.f32 %v580, 0.5
    %v585 = vmul.f32 %v577, 0.70710677
    %v586 = vmul.f32 %v580, 0.70710677
    %v587 = verf.f32.pop %v585
    %v588 = verf.f32.pop %v586
    %v589 = vadd.f32 %v587, 1.0
    %v590 = vadd.f32 %v588, 1.0
    %v591 = vmul.f32 %v583, %v589
    %v592 = vmul.f32 %v584, %v590
    %v593 = vpack.c.bf16 %v592, %v591
    %v594 = vld [vmem:[%s5] sm:$0xf]
    %v595 = vld [vmem:[%s5 + $0x4] sm:$0xf]
    %v596 = vld [vmem:[%s5 + $0x8] sm:$0xf]
    %v597 = vld [vmem:[%s5 + $0xc] sm:$0xf]
    %v598 = vld [vmem:[%s5 + $0x10] sm:$0xf]
    %v599 = vld [vmem:[%s5 + $0x14] sm:$0xf]
    %v600 = vld [vmem:[%s5 + $0x18] sm:$0xf]
    %v601 = vld [vmem:[%s5 + $0x1c] sm:$0xf]
    %v602 = vlaneseq
    %v603 = vshrl.u32 %v602, 7
    %v604 = vsub.s32 3, %v603
    %v605 = vrot.slane %v86, %v604
    %v614 = vunpack.c.l.b16 %v594
    %v615 = vunpack.c.l.b16 %v595
    %v616 = vunpack.c.l.b16 %v596
    %v617 = vunpack.c.l.b16 %v597
    %v618 = vunpack.c.l.b16 %v598
    %v619 = vunpack.c.l.b16 %v599
    %v620 = vunpack.c.l.b16 %v600
    %v621 = vunpack.c.l.b16 %v601
    %v622 = vpack.c.b16 %v615, %v614
    %v623 = vpack.c.b16 %v617, %v616
    %v624 = vpack.c.b16 %v619, %v618
    %v625 = vpack.c.b16 %v621, %v620
    %vm630 = vcmask 523264
    %v632 = vsel %vm630, %v593, 0
    %634 = vmatprep.subr.bf16.mxu0 0
    %635 = vmatpush1.bf16.msra.mxu0 0
    %636 = vmatprep.subr.bf16.mxu0 0
    %637 = vmatpush1.bf16.msra.mxu0 0
    %638 = vmatprep.subr.bf16.mxu0 0
    %639 = vmatpush1.bf16.msra.mxu0 0
    %640 = vmatprep.subr.bf16.mxu0 0
    %641 = vmatpush1.bf16.msra.mxu0 0
    %642 = vmatprep.subr.bf16.mxu0 0
    %643 = vmatpush1.bf16.msra.mxu0 %v625
    %644 = vmatprep.subr.bf16.mxu0 0
    %645 = vmatpush1.bf16.msra.mxu0 %v624
    %646 = vmatprep.subr.bf16.mxu0 0
    %647 = vmatpush1.bf16.msra.mxu0 %v623
    %648 = vmatprep.subr.bf16.mxu0 0
    %649 = vmatpush1.bf16.msra.mxu0 %v622
    %650 = vmatprep.subr.bf16.mxu0 0
    %651 = vmatpush2.bf16.msra.mxu0 0
    %652 = vmatprep.subr.bf16.mxu0 0
    %653 = vmatpush2.bf16.msra.mxu0 0
    %654 = vmatprep.subr.bf16.mxu0 0
    %655 = vmatpush2.bf16.msra.mxu0 0
    %656 = vmatprep.subr.bf16.mxu0 0
    %657 = vmatpush2.bf16.msra.mxu0 0
    %658 = vmatprep.subr.bf16.mxu0 0
    %659 = vmatpush2.bf16.msra.mxu0 0
    %660 = vmatprep.subr.bf16.mxu0 0
    %661 = vmatpush2.bf16.msra.mxu0 0
    %662 = vmatprep.subr.bf16.mxu0 0
    %663 = vmatpush2.bf16.msra.mxu0 0
    %664 = vmatprep.subr.bf16.mxu0 0
    %665 = vmatpush2.bf16.msra.mxu0 0
    %666 = vmatprep.mubr.bf16.mxu0 0
    %667 = vmatmul.mubr.bf16.gmra.mxu0 %v632
    %v668 = vpop.f32.mrf.mxu0
    %v669 = vadd.f32 %v605, %v668
    %v670 = vpop.f32.mrf.mxu0
    %v671 = vpop.f32.mrf.mxu0
    %v672 = vadd.f32 %v605, %v671
    %v673 = vpop.f32.mrf.mxu0
    %674 = vdwg.mxu0
    %v675 = vadd.f32 %v669, %v516
    %v676 = vadd.f32 %v672, %v517
    %v677 = vsel %vm108, %v675, 0.0
    %678 = vadd.xlane.f32.xlu0 %v677
    %v679 = vpop.xlane.xlu0 %678
    %v680 = vsel %vm108, %v676, 0.0
    %681 = vadd.xlane.f32.xlu0 %v680
    %v682 = vpop.xlane.xlu0 %681
    %v683 = vmul.f32 %v679, %v366
    %v684 = vmul.f32 %v682, %v366
    %v685 = vmul.f32 %v675, %v675
    %v686 = vmul.f32 %v676, %v676
    %v687 = vsel %vm108, %v685, 0.0
    %688 = vadd.xlane.f32.xlu0 %v687
    %v689 = vpop.xlane.xlu0 %688
    %v690 = vsel %vm108, %v686, 0.0
    %691 = vadd.xlane.f32.xlu0 %v690
    %v692 = vpop.xlane.xlu0 %691
    %v693 = vmul.f32 %v689, %v366
    %v694 = vmul.f32 %v692, %v366
    %v695 = vmul.f32 %v683, %v683
    %v696 = vmul.f32 %v684, %v684
    %v697 = vsub.f32 %v693, %v695
    %v698 = vsub.f32 %v694, %v696
    %v699 = vmax.f32 %v697, 0.0
    %v700 = vmax.f32 %v698, 0.0
    %v701 = vsub.f32 %v675, %v683
    %v702 = vsub.f32 %v676, %v684
    %v703 = vadd.f32 %v699, 1e-12
    %v704 = vadd.f32 %v700, 1e-12
    %v705 = vrsqrt.pop %v703
    %v706 = vrsqrt.pop %v704
    %v707 = vmul.f32 %v701, %v705
    %v708 = vmul.f32 %v702, %v706
    %v709 = vlaneseq
    %v710 = vshrl.u32 %v709, 7
    %v711 = vsub.s32 0, %v710
    %v712 = vrot.slane %v87, %v711
    %v713 = vmul.f32 %v707, %v712
    %v714 = vmul.f32 %v708, %v712
    %v715 = vlaneseq
    %v716 = vshrl.u32 %v715, 7
    %v717 = vsub.s32 1, %v716
    %v718 = vrot.slane %v87, %v717
    %v719 = vadd.f32 %v713, %v718
    %v720 = vadd.f32 %v714, %v718
    %721 = vst.msk [vmem:[#allocation10] sm:$0xff] %vm108, %v719
    %722 = vst.msk [vmem:[#allocation10 + $0x8] sm:$0xff] %vm108, %v720
    // Predicated region
    $region46: #{bsarec_block.1} parent=1 // pred_check
      _
    $region47: #{bsarec_block.1} parent=1 // pred_check_branch
      %724 = sbr.rel (0) target = $region49
    $region48: #{bsarec_block.1} parent=1 // pred_region
      %s726 = ssub.s32 256, 256
      %727 = vsyncadd [#allocation4], %s726
      %s728 = sshll.u32 [#allocation10], 4
      %s729 = int_to_ptr.vmem [resolvable:$true] %s728
      %734 = dma.vmem_to_hbm [thread:$0]  %s729, 256, %s7, [#allocation4], 128, 128, 8
    $region49: #{bsarec_block.1} parent=1 // pred_fallthru
      _
    // Predicated region
    $region50: #{bsarec_block.1} parent=1 // pred_check
      _
    $region51: #{bsarec_block.1} parent=1 // pred_check_branch
      %736 = sbr.rel (0) target = $region53
    $region52: #{bsarec_block.1} parent=1 // pred_region
      %737 = dma.done [#allocation4], 256
    $region53: #{bsarec_block.1} parent=1 // pred_fallthru
      _
    %738 = vsyncpa [#allocation3], 1
    %739 = vsyncpa [#allocation6], 1
    %740 = vsyncpa [#allocation9], 1
    %741 = vsyncpa [#allocation4], 1

</llo_original>
